<compile_context>
chip_gen: v5e
topology: v5e:2x2
jax: 0.10.0
libtpu: 0.0.40
codegen_flags: <defaults>
</compile_context>

<pallas_src>
import functools

import jax
import jax.numpy as jnp
from jax.experimental import pallas as pl
from jax.experimental.pallas import tpu as pltpu

ALPHA = 2.0      # self.beta = alpha in the PyTorch module
EPS = 1e-5


def _avu_kernel(logits_ref, labels_ref, thr_ref, out_ref, acc_ref, *, n_total):
    """Processes one (bn, C) tile; accumulates per-partition partial sums."""
    i = pl.program_id(1)                          # inner ("arbitrary") step

    @pl.when(i == 0)
    def _init():
        acc_ref[...] = jnp.zeros_like(acc_ref)

    x = logits_ref[...].astype(jnp.float32)       # (bn, C), cast in-kernel
    labels = labels_ref[...]                      # (bn, 1) int32
    thr = thr_ref[0]                              # scalar f32 from SMEM

    bn, c = x.shape

    # Global (unclamped) tile index -> row ids; mask ragged / duplicated tiles.
    tile = pl.program_id(0) * pl.num_programs(1) + i
    row = tile * bn + jax.lax.broadcasted_iota(jnp.int32, (bn, 1), 0)
    valid = row < n_total                          # (bn, 1) bool

    # Row max + first-occurrence argmax on the raw logits (== torch.max on
    # probs since softmax is monotone and preserves ties).
    m = jnp.max(x, axis=-1, keepdims=True)                              # (bn,1)
    lane_c = jax.lax.broadcasted_iota(jnp.int32, (bn, c), 1)
    pred = jnp.min(jnp.where(x == m, lane_c, c), axis=-1, keepdims=True)

    e = jnp.exp(x - m)                                                   # (bn,C)
    z = jnp.sum(e, axis=-1, keepdims=True)                               # (bn,1)
    inv_z = pl.reciprocal(z)        # exact: feeds unc and the threshold compare
    conf = inv_z                    # max prob == exp(0) / Z == 1 / Z

    # Exact torch-style predictive entropy: -sum(p * log(p + eps)).
    p = e * inv_z
    unc = -jnp.sum(p * jnp.log(p + EPS), axis=-1, keepdims=True)         # (bn,1)

    accurate = labels == pred
    certain = unc <= thr
    t = jnp.tanh(unc)

    # Shared contribution, binned into the four AvU quadrants.
    contrib = jnp.where(accurate, conf, 1.0 - conf) * jnp.where(certain, 1.0 - t, t)

    # Lane-indexed combined accumulator: lanes 0..3 = n_ac,n_au,n_ic,n_iu,
    # lane 4 = sum(unc); plain elementwise adds each step (no XLU reduce).
    lane_sel = jax.lax.broadcasted_iota(jnp.int32, (1, 128), 1)
    upd = jnp.where(valid & accurate & certain & (lane_sel == 0), contrib, 0.0)
    upd = jnp.where(valid & accurate & ~certain & (lane_sel == 1), contrib, upd)
    upd = jnp.where(valid & ~accurate & certain & (lane_sel == 2), contrib, upd)
    upd = jnp.where(valid & ~accurate & ~certain & (lane_sel == 3), contrib, upd)
    upd = jnp.where(valid & (lane_sel == 4), unc, upd)
    acc_ref[...] += upd                                                  # (bn,128)

    @pl.when(i == pl.num_programs(1) - 1)
    def _finalize():
        sums = jnp.sum(acc_ref[...], axis=0, keepdims=True)              # (1,128)
        out_ref[...] = jnp.broadcast_to(sums, out_ref.shape)             # (1,8,128)


def _vmem_capacity_bytes():
    try:
        return int(pltpu.get_tpu_info().vmem_capacity_bytes)
    except Exception:  # conservative default (v7x per-core size)
        return 64 * 1024 * 1024


def _pick_block_rows(n, c, itemsize):
    """Rows per tile + vmem limit, counting padded blocks AND f32 temporaries."""
    lane = 128
    c_pad = ((c + lane - 1) // lane) * lane
    cap = _vmem_capacity_bytes()
    if cap >= 100 * 1024 * 1024:           # v5e / v6e: 128 MiB VMEM
        budget = 64 * 1024 * 1024
        base_limit = 96 * 1024 * 1024
    else:                                   # v7x: 64 MiB per TensorCore
        budget = 36 * 1024 * 1024
        base_limit = 48 * 1024 * 1024

    # Per-row VMEM footprint (lane-padded layouts):
    #   2x double-buffered logits block (native dtype)
    #   2x double-buffered labels column (int32, 1 -> 128 lane pad)
    #   ~6 tile-sized f32/i32 temporaries (cast, exp, p, log(p+eps), iota, cmp)
    #   1  (bn,128) combined accumulator scratch
    #   ~8 per-row (bn,1)/(bn,128) f32 temporaries (m, z, unc, pred, masks, upd)
    row_bytes = (2 * c_pad * itemsize
                 + 2 * lane * 4
                 + 6 * c_pad * 4
                 + lane * 4
                 + 8 * lane * 4)

    bn = budget // row_bytes
    bn = max(8, (int(bn) // 8) * 8)        # sublane-friendly; floor of 8 rows
    if bn >= n:
        bn = n

    est = row_bytes * max(bn, 8) + (8 << 20)     # + headroom for compiler scratch
    limit = int(min(int(cap * 0.85), max(base_limit, est)))
    return bn, limit


def avu_loss(logits, labels, optimal_uncertainty_threshold, *, block_rows=None):
    """Returns (avu_loss of shape (1,), expected_unc scalar) like the torch module."""
    n, c = logits.shape
    itemsize = jnp.dtype(logits.dtype).itemsize
    bn, vmem_limit = _pick_block_rows(n, c, itemsize)
    if block_rows is not None:                       # test hook / manual override
        bn = min(n, max(8, (int(block_rows) // 8) * 8))

    total_tiles = pl.cdiv(n, bn)
    num_parts = 2 if total_tiles >= 2 else 1         # sharded across TCs on v7x
    tiles_per_part = pl.cdiv(total_tiles, num_parts)
    grid = (num_parts, tiles_per_part)

    labels_2d = labels.astype(jnp.int32).reshape(n, 1)
    thr = jnp.asarray(optimal_uncertainty_threshold, jnp.float32).reshape(1)

    def tile_map(p, i):
        t = p * tiles_per_part + i
        return (jnp.minimum(t, total_tiles - 1), 0)   # clamp; mask handles overrun

    kernel = functools.partial(_avu_kernel, n_total=n)

    cost = pl.CostEstimate(
        flops=10 * n * c,
        transcendentals=2 * n * c + 4 * n,            # exp+log per element; tanh/rcp per row
        bytes_accessed=n * c * itemsize + n * 4 + num_parts * 8 * 128 * 4 + 4,
    )

    partials = pl.pallas_call(
        kernel,
        out_shape=jax.ShapeDtypeStruct((num_parts, 8, 128), jnp.float32),
        grid=grid,
        in_specs=[
            pl.BlockSpec((bn, c), tile_map),                         # logits (native dtype)
            pl.BlockSpec((bn, 1), tile_map),                         # labels
            pl.BlockSpec(memory_space=pltpu.MemorySpace.SMEM),       # threshold scalar
        ],
        out_specs=pl.BlockSpec((1, 8, 128), lambda p, i: (p, 0, 0)),
        scratch_shapes=[pltpu.VMEM((bn, 128), jnp.float32)],
        compiler_params=pltpu.CompilerParams(
            dimension_semantics=("parallel", "arbitrary"),
            vmem_limit_bytes=vmem_limit,
        ),
        cost_estimate=cost,
    )(logits, labels_2d, thr)

    # Finalize (tiny) in plain JAX: sum partition partials, log/divide.
    tot = jnp.sum(partials[:, 0, 0:5], axis=0)
    n_ac, n_au, n_ic, n_iu, s_unc = tot[0], tot[1], tot[2], tot[3], tot[4]
    avu = (n_ac + n_iu) / (n_ac + n_au + n_ic + n_iu + EPS)
    loss = (-1.0 * ALPHA * jnp.log(avu + EPS)).reshape(1)
    eunc = s_unc / jnp.float32(n)
    return loss, eunc


def _reference(logits, labels, thr):
    """Pure-JAX mirror of AvULoss.forward (type=0) semantics."""
    probs = jax.nn.softmax(logits.astype(jnp.float32), axis=1)
    conf = jnp.max(probs, axis=1)
    pred = jnp.argmax(probs, axis=1)
    unc = -jnp.sum(probs * jnp.log(probs + EPS), axis=-1)
    acc = labels.astype(jnp.int32) == pred.astype(jnp.int32)
    cert = unc <= thr
    t = jnp.tanh(unc)
    n_ac = jnp.sum(jnp.where(acc & cert, conf * (1 - t), 0.0))
    n_au = jnp.sum(jnp.where(acc & ~cert, conf * t, 0.0))
    n_ic = jnp.sum(jnp.where(~acc & cert, (1 - conf) * (1 - t), 0.0))
    n_iu = jnp.sum(jnp.where(~acc & ~cert, (1 - conf) * t, 0.0))
    avu = (n_ac + n_iu) / (n_ac + n_au + n_ic + n_iu + EPS)
    return -ALPHA * jnp.log(avu + EPS), jnp.mean(unc)


if __name__ == "__main__":
    key = jax.random.PRNGKey(0)
    threshold = 1.0                           # optimal_uncertainty_threshold

    # Test 1: small single-tile case (batch=8, classes=16), auto block size.
    k1, k2 = jax.random.split(key)
    N1, C1 = 8, 16
    logits1 = jax.random.normal(k1, (N1, C1), dtype=jnp.float32) * 2.0
    labels1 = jax.random.randint(k2, (N1,), 0, C1, dtype=jnp.int32)
    loss1, eunc1 = avu_loss(logits1, labels1, threshold)
    jax.block_until_ready((loss1, eunc1))
    ref_loss1, ref_eunc1 = _reference(logits1, labels1, threshold)
    assert jnp.allclose(loss1[0], ref_loss1, atol=1e-4, rtol=1e-4), (loss1[0], ref_loss1)
    assert jnp.allclose(eunc1, ref_eunc1, atol=1e-4, rtol=1e-4), (eunc1, ref_eunc1)

    # Test 2: multi-tile, ragged tail, 2 partitions (forced 8-row tiles).
    k3, k4 = jax.random.split(k2)
    N2, C2 = 37, 16
    logits2 = jax.random.normal(k3, (N2, C2), dtype=jnp.float32) * 2.0
    labels2 = jax.random.randint(k4, (N2,), 0, C2, dtype=jnp.int32)
    loss2, eunc2 = avu_loss(logits2, labels2, threshold, block_rows=8)
    jax.block_until_ready((loss2, eunc2))
    ref_loss2, ref_eunc2 = _reference(logits2, labels2, threshold)
    assert jnp.allclose(loss2[0], ref_loss2, atol=1e-4, rtol=1e-4), (loss2[0], ref_loss2)
    assert jnp.allclose(eunc2, ref_eunc2, atol=1e-4, rtol=1e-4), (eunc2, ref_eunc2)

    print("KERNEL_OK")
</pallas_src>

<mosaic_0001>
module attributes {stable_mosaic.version = 11 : i64} {
  func.func @_avu_kernel(%arg0: i32, %arg1: i32, %arg2: memref<8x16xf32, #tpu.memory_space<vmem>>, %arg3: memref<8x1xi32, #tpu.memory_space<vmem>>, %arg4: memref<1xf32, #tpu.memory_space<smem>>, %arg5: memref<1x8x128xf32, #tpu.memory_space<vmem>>, %arg6: memref<8x128xf32, #tpu.memory_space<vmem>>) attributes {dimension_semantics = [#tpu.dimension_semantics<parallel>, #tpu.dimension_semantics<arbitrary>], iteration_bounds = array<i64: 1, 1>, scalar_prefetch = 0 : i64, scratch_operands = 1 : i64, tpu.core_type = #tpu.core_type<tc>, window_params = [{transform_indices = @transform_0, window_bounds = array<i64: 8, 16>}, {transform_indices = @transform_1, window_bounds = array<i64: 8, 1>}, {transform_indices = @transform_2, window_bounds = array<i64: 1>}, {transform_indices = @transform_3, window_bounds = array<i64: 1, 8, 128>}]} {
    %c0_i32 = arith.constant 0 : i32
    %0 = arith.cmpi eq, %arg1, %c0_i32 : i32
    %1 = arith.extui %0 : i1 to i32
    %c0_i32_0 = arith.constant 0 : i32
    %2 = arith.cmpi ne, %1, %c0_i32_0 : i32
    scf.if %2 {
      %cst_26 = arith.constant 0.000000e+00 : f32
      %110 = vector.broadcast %cst_26 : f32 to vector<8x128xf32>
      %c0_27 = arith.constant 0 : index
      %c0_28 = arith.constant 0 : index
      %111 = vector.load %arg6[%c0_27, %c0_28] : memref<8x128xf32, #tpu.memory_space<vmem>>, vector<8x128xf32>
      tpu.vector_store %arg6[%c0_27, %c0_28], %110 {strides = array<i32>} : memref<8x128xf32, #tpu.memory_space<vmem>>, vector<8x128xf32>,
    } else {
    }
    %c0 = arith.constant 0 : index
    %c0_1 = arith.constant 0 : index
    %3 = vector.load %arg2[%c0, %c0_1] : memref<8x16xf32, #tpu.memory_space<vmem>>, vector<8x16xf32>
    %c0_2 = arith.constant 0 : index
    %c0_3 = arith.constant 0 : index
    %4 = vector.load %arg3[%c0_2, %c0_3] : memref<8x1xi32, #tpu.memory_space<vmem>>, vector<8x1xi32>
    %c0_4 = arith.constant 0 : index
    %5 = memref.load %arg4[%c0_4] : memref<1xf32, #tpu.memory_space<smem>>
    %c1_i32 = arith.constant 1 : i32
    %6 = arith.muli %arg0, %c1_i32 : i32
    %7 = arith.addi %6, %arg1 : i32
    %c8_i32 = arith.constant 8 : i32
    %8 = arith.muli %7, %c8_i32 : i32
    %9 = tpu.iota {dimensions = array<i32: 0>} : vector<8x1xi32>
    %10 = vector.broadcast %8 : i32 to vector<8x1xi32>
    %11 = arith.addi %10, %9 : vector<8x1xi32>
    %c8_i32_5 = arith.constant 8 : i32
    %12 = vector.broadcast %c8_i32_5 : i32 to vector<8x1xi32>
    %13 = arith.cmpi slt, %11, %12 : vector<8x1xi32>
    %cst = arith.constant dense<0xFF800000> : vector<8xf32>
    %14 = vector.multi_reduction <maximumf>, %3, %cst [1] : vector<8x16xf32> to vector<8xf32>
    %15 = vector.shape_cast %14 : vector<8xf32> to vector<8x1xf32>
    %16 = tpu.iota {dimensions = array<i32: 1>} : vector<8x16xi32>
    %17 = vector.broadcast %15 : vector<8x1xf32> to vector<8x16xf32>
    %18 = arith.cmpf oeq, %3, %17 : vector<8x16xf32>
    %c16_i32 = arith.constant 16 : i32
    %19 = vector.broadcast %c16_i32 : i32 to vector<8x16xi32>
    %20 = arith.select %18, %16, %19 : vector<8x16xi1>, vector<8x16xi32>
    %cst_6 = arith.constant dense<2147483647> : vector<8xi32>
    %21 = vector.multi_reduction <minsi>, %20, %cst_6 [1] : vector<8x16xi32> to vector<8xi32>
    %22 = vector.shape_cast %21 : vector<8xi32> to vector<8x1xi32>
    %23 = vector.broadcast %15 : vector<8x1xf32> to vector<8x16xf32>
    %24 = arith.subf %3, %23 : vector<8x16xf32>
    %25 = math.exp %24 : vector<8x16xf32>
    %cst_7 = arith.constant dense<0.000000e+00> : vector<8xf32>
    %26 = vector.multi_reduction <add>, %25, %cst_7 [1] : vector<8x16xf32> to vector<8xf32>
    %27 = vector.shape_cast %26 : vector<8xf32> to vector<8x1xf32>
    %28 = tpu.reciprocal %27 : vector<8x1xf32> -> vector<8x1xf32>
    %29 = vector.broadcast %28 : vector<8x1xf32> to vector<8x16xf32>
    %30 = arith.mulf %25, %29 : vector<8x16xf32>
    %cst_8 = arith.constant 9.99999974E-6 : f32
    %31 = vector.broadcast %cst_8 : f32 to vector<8x16xf32>
    %32 = arith.addf %30, %31 : vector<8x16xf32>
    %33 = math.log %32 : vector<8x16xf32>
    %34 = arith.mulf %30, %33 : vector<8x16xf32>
    %cst_9 = arith.constant dense<0.000000e+00> : vector<8xf32>
    %35 = vector.multi_reduction <add>, %34, %cst_9 [1] : vector<8x16xf32> to vector<8xf32>
    %36 = vector.shape_cast %35 : vector<8xf32> to vector<8x1xf32>
    %cst_10 = arith.constant 0.000000e+00 : f32
    %37 = vector.broadcast %cst_10 : f32 to vector<8x1xf32>
    %38 = arith.subf %37, %36 : vector<8x1xf32>
    %39 = arith.cmpi eq, %4, %22 : vector<8x1xi32>
    %40 = vector.broadcast %5 : f32 to vector<8x1xf32>
    %41 = arith.cmpf ole, %38, %40 : vector<8x1xf32>
    %42 = math.tanh %38 : vector<8x1xf32>
    %cst_11 = arith.constant 1.000000e+00 : f32
    %43 = vector.broadcast %cst_11 : f32 to vector<8x1xf32>
    %44 = arith.subf %43, %28 : vector<8x1xf32>
    %45 = arith.select %39, %28, %44 : vector<8x1xi1>, vector<8x1xf32>
    %cst_12 = arith.constant 1.000000e+00 : f32
    %46 = vector.broadcast %cst_12 : f32 to vector<8x1xf32>
    %47 = arith.subf %46, %42 : vector<8x1xf32>
    %48 = arith.select %41, %47, %42 : vector<8x1xi1>, vector<8x1xf32>
    %49 = arith.mulf %45, %48 : vector<8x1xf32>
    %50 = tpu.iota {dimensions = array<i32: 1>} : vector<1x128xi32>
    %51 = arith.andi %13, %39 : vector<8x1xi1>
    %52 = arith.andi %51, %41 : vector<8x1xi1>
    %c0_i32_13 = arith.constant 0 : i32
    %53 = vector.broadcast %c0_i32_13 : i32 to vector<1x128xi32>
    %54 = arith.cmpi eq, %50, %53 : vector<1x128xi32>
    %55 = vector.broadcast %52 : vector<8x1xi1> to vector<8x128xi1>
    %56 = vector.broadcast %54 : vector<1x128xi1> to vector<8x128xi1>
    %57 = arith.andi %55, %56 : vector<8x128xi1>
    %cst_14 = arith.constant 0.000000e+00 : f32
    %58 = vector.shape_cast %49 : vector<8x1xf32> to vector<8x1xf32>
    %59 = vector.broadcast %58 : vector<8x1xf32> to vector<8x128xf32>
    %60 = vector.broadcast %cst_14 : f32 to vector<8x128xf32>
    %61 = arith.select %57, %59, %60 : vector<8x128xi1>, vector<8x128xf32>
    %62 = arith.andi %13, %39 : vector<8x1xi1>
    %cst_15 = arith.constant dense<true> : vector<8x1xi1>
    %63 = arith.xori %41, %cst_15 : vector<8x1xi1>
    %64 = arith.andi %62, %63 : vector<8x1xi1>
    %c1_i32_16 = arith.constant 1 : i32
    %65 = vector.broadcast %c1_i32_16 : i32 to vector<1x128xi32>
    %66 = arith.cmpi eq, %50, %65 : vector<1x128xi32>
    %67 = vector.broadcast %64 : vector<8x1xi1> to vector<8x128xi1>
    %68 = vector.broadcast %66 : vector<1x128xi1> to vector<8x128xi1>
    %69 = arith.andi %67, %68 : vector<8x128xi1>
    %70 = vector.shape_cast %49 : vector<8x1xf32> to vector<8x1xf32>
    %71 = vector.broadcast %70 : vector<8x1xf32> to vector<8x128xf32>
    %72 = arith.select %69, %71, %61 : vector<8x128xi1>, vector<8x128xf32>
    %cst_17 = arith.constant dense<true> : vector<8x1xi1>
    %73 = arith.xori %39, %cst_17 : vector<8x1xi1>
    %74 = arith.andi %13, %73 : vector<8x1xi1>
    %75 = arith.andi %74, %41 : vector<8x1xi1>
    %c2_i32 = arith.constant 2 : i32
    %76 = vector.broadcast %c2_i32 : i32 to vector<1x128xi32>
    %77 = arith.cmpi eq, %50, %76 : vector<1x128xi32>
    %78 = vector.broadcast %75 : vector<8x1xi1> to vector<8x128xi1>
    %79 = vector.broadcast %77 : vector<1x128xi1> to vector<8x128xi1>
    %80 = arith.andi %78, %79 : vector<8x128xi1>
    %81 = vector.shape_cast %49 : vector<8x1xf32> to vector<8x1xf32>
    %82 = vector.broadcast %81 : vector<8x1xf32> to vector<8x128xf32>
    %83 = arith.select %80, %82, %72 : vector<8x128xi1>, vector<8x128xf32>
    %cst_18 = arith.constant dense<true> : vector<8x1xi1>
    %84 = arith.xori %39, %cst_18 : vector<8x1xi1>
    %85 = arith.andi %13, %84 : vector<8x1xi1>
    %cst_19 = arith.constant dense<true> : vector<8x1xi1>
    %86 = arith.xori %41, %cst_19 : vector<8x1xi1>
    %87 = arith.andi %85, %86 : vector<8x1xi1>
    %c3_i32 = arith.constant 3 : i32
    %88 = vector.broadcast %c3_i32 : i32 to vector<1x128xi32>
    %89 = arith.cmpi eq, %50, %88 : vector<1x128xi32>
    %90 = vector.broadcast %87 : vector<8x1xi1> to vector<8x128xi1>
    %91 = vector.broadcast %89 : vector<1x128xi1> to vector<8x128xi1>
    %92 = arith.andi %90, %91 : vector<8x128xi1>
    %93 = vector.shape_cast %49 : vector<8x1xf32> to vector<8x1xf32>
    %94 = vector.broadcast %93 : vector<8x1xf32> to vector<8x128xf32>
    %95 = arith.select %92, %94, %83 : vector<8x128xi1>, vector<8x128xf32>
    %c4_i32 = arith.constant 4 : i32
    %96 = vector.broadcast %c4_i32 : i32 to vector<1x128xi32>
    %97 = arith.cmpi eq, %50, %96 : vector<1x128xi32>
    %98 = vector.broadcast %13 : vector<8x1xi1> to vector<8x128xi1>
    %99 = vector.broadcast %97 : vector<1x128xi1> to vector<8x128xi1>
    %100 = arith.andi %98, %99 : vector<8x128xi1>
    %101 = vector.shape_cast %38 : vector<8x1xf32> to vector<8x1xf32>
    %102 = vector.broadcast %101 : vector<8x1xf32> to vector<8x128xf32>
    %103 = arith.select %100, %102, %95 : vector<8x128xi1>, vector<8x128xf32>
    %c0_20 = arith.constant 0 : index
    %c0_21 = arith.constant 0 : index
    %104 = vector.load %arg6[%c0_20, %c0_21] : memref<8x128xf32, #tpu.memory_space<vmem>>, vector<8x128xf32>
    %105 = arith.addf %104, %103 : vector<8x128xf32>
    %c0_22 = arith.constant 0 : index
    %c0_23 = arith.constant 0 : index
    %106 = vector.load %arg6[%c0_22, %c0_23] : memref<8x128xf32, #tpu.memory_space<vmem>>, vector<8x128xf32>
    tpu.vector_store %arg6[%c0_22, %c0_23], %105 {strides = array<i32>} : memref<8x128xf32, #tpu.memory_space<vmem>>, vector<8x128xf32>,
    %c0_i32_24 = arith.constant 0 : i32
    %107 = arith.cmpi eq, %arg1, %c0_i32_24 : i32
    %108 = arith.extui %107 : i1 to i32
    %c0_i32_25 = arith.constant 0 : i32
    %109 = arith.cmpi ne, %108, %c0_i32_25 : i32
    scf.if %109 {
      %c0_26 = arith.constant 0 : index
      %c0_27 = arith.constant 0 : index
      %110 = vector.load %arg6[%c0_26, %c0_27] : memref<8x128xf32, #tpu.memory_space<vmem>>, vector<8x128xf32>
      %cst_28 = arith.constant dense<0.000000e+00> : vector<128xf32>
      %111 = vector.multi_reduction <add>, %110, %cst_28 [0] : vector<8x128xf32> to vector<128xf32>
      %112 = vector.shape_cast %111 : vector<128xf32> to vector<1x128xf32>
      %113 = vector.shape_cast %112 : vector<1x128xf32> to vector<1x1x128xf32>
      %114 = vector.broadcast %113 : vector<1x1x128xf32> to vector<1x8x128xf32>
      %c0_29 = arith.constant 0 : index
      %c0_30 = arith.constant 0 : index
      %c0_31 = arith.constant 0 : index
      %115 = vector.load %arg5[%c0_29, %c0_30, %c0_31] : memref<1x8x128xf32, #tpu.memory_space<vmem>>, vector<1x8x128xf32>
      tpu.vector_store %arg5[%c0_29, %c0_30, %c0_31], %114 {strides = array<i32>} : memref<1x8x128xf32, #tpu.memory_space<vmem>>, vector<1x8x128xf32>,
    } else {
    }
    return
  }
  func.func @transform_0(%arg0: i32, %arg1: i32) -> (i32, i32) {
    %c1_i32 = arith.constant 1 : i32
    %0 = arith.muli %arg0, %c1_i32 : i32
    %1 = arith.addi %0, %arg1 : i32
    %c0_i32 = arith.constant 0 : i32
    %2 = arith.minsi %1, %c0_i32 : i32
    %c0_i32_0 = arith.constant 0 : i32
    %c0_i32_1 = arith.constant 0 : i32
    return %2, %c0_i32_0 : i32, i32
  }
  func.func @transform_1(%arg0: i32, %arg1: i32) -> (i32, i32) {
    %c1_i32 = arith.constant 1 : i32
    %0 = arith.muli %arg0, %c1_i32 : i32
    %1 = arith.addi %0, %arg1 : i32
    %c0_i32 = arith.constant 0 : i32
    %2 = arith.minsi %1, %c0_i32 : i32
    %c0_i32_0 = arith.constant 0 : i32
    %c0_i32_1 = arith.constant 0 : i32
    return %2, %c0_i32_0 : i32, i32
  }
  func.func @transform_2(%arg0: i32, %arg1: i32) -> i32 {
    %c0_i32 = arith.constant 0 : i32
    %c0_i32_0 = arith.constant 0 : i32
    return %c0_i32 : i32
  }
  func.func @transform_3(%arg0: i32, %arg1: i32) -> (i32, i32, i32) {
    %c0_i32 = arith.constant 0 : i32
    %c0_i32_0 = arith.constant 0 : i32
    %c0_i32_1 = arith.constant 0 : i32
    return %arg0, %c0_i32, %c0_i32_0 : i32, i32, i32
  }
}

</mosaic_0001>

<llo_original>
// kernel: tpu_custom_call.1
$region0: #{tpu_custom_call.1}
  #allocation0 [shape = 'u32[]', space=smem, size = 0x4, offset = 0x4, fixed_abs, tag = 'smem constant byte address 0x4 - core index']
  #allocation1 [shape = 'u32[72,128]{1,0:T(1,128)}', space=vmem, size = 0x9000, scoped, tag = 'internal scratch']
  #allocation2 [shape = 'f32[8,128]{1,0:T(8,128)}', space=vmem, size = 0x1000, scoped, tag = 'scratch operand']
  #allocation3 [shape = 'f32[1]{0:T(128)S(6)}', space=smem, size = 0x200, scoped, tag = 'scoped memory for tpu_custom_call.1']
  %s0 = inlined_call_operand.vmem [shape: f32[8,16], index: 0, kind: input, shape index: {}]
  %s1 = inlined_call_operand.vmem [shape: s32[8,1], index: 1, kind: input, shape index: {}]
  %s2 = inlined_call_operand.<no memory space> [shape: f32[1], index: 2, kind: input, shape index: {}]
  %s3 = inlined_call_operand.hbm [shape: f32[1,8,128], index: 3, kind: output, shape index: {}]
  %s4 = sld [smem:[#allocation0]]
  $region30: #{tpu_custom_call.1} parent=0
    _
  %s6 = ssub.s32 1, %s4
  %s7 = scalar_select 0, %s6, %s4
  %8 = sst [smem:[#allocation3]] %s2
  $region1: #{tpu_custom_call.1} parent=0
    #allocation4 [shape = 'u8[4096]{0}', space=vmem, size = 0x1000, scoped, tag = 'output window, operand 0, single buffered']
    #allocation5 [shape = 's32[1]{0}', space=sflag, size = 0x4, scoped, tag = 'scoped memory for tpu_custom_call.1']
    %9 = vsyncpa [#allocation5], 0
    // Predicated region
    $region2: #{tpu_custom_call.1} parent=1 // pred_check
      _
    $region3: #{tpu_custom_call.1} parent=1 // pred_check_branch
      %11 = sbr.rel (0) target = $region5
    $region4: #{tpu_custom_call.1} parent=1 // pred_region
      %s12 = sadd.s32 0, 0
      %p13 = scmp.lt.s32.totalorder %s12, 0
      %s14 = scalar_select %p13, %s12, 0
      %p15 = scmp.lt.s32.totalorder %s14, 0
      %s16 = scalar_select %p15, %s14, 0
      %s17 = smul.addr %s16, 8
      %s18 = scalar_lea.vmem %s0, %s17
      %s19 = sadd.s32 0, 0
      %p20 = scmp.lt.s32.totalorder %s19, 0
      %s21 = scalar_select %p20, %s19, 0
    $region5: #{tpu_custom_call.1} parent=1 // pred_fallthru
      _
    // Predicated region
    $region6: #{tpu_custom_call.1} parent=1 // pred_check
      _
    $region7: #{tpu_custom_call.1} parent=1 // pred_check_branch
      %23 = sbr.rel (0) target = $region9
    $region8: #{tpu_custom_call.1} parent=1 // pred_region
      %s24 = sadd.s32 0, 0
      %p25 = scmp.lt.s32.totalorder %s24, 0
      %s26 = scalar_select %p25, %s24, 0
      %p27 = scmp.lt.s32.totalorder %s26, 0
      %s28 = scalar_select %p27, %s26, 0
      %s29 = smul.addr %s28, 8
      %s30 = scalar_lea.vmem %s1, %s29
      %s31 = sadd.s32 0, 0
      %p32 = scmp.lt.s32.totalorder %s31, 0
      %s33 = scalar_select %p32, %s31, 0
    $region9: #{tpu_custom_call.1} parent=1 // pred_fallthru
      _
    // Predicated region
    $region10: #{tpu_custom_call.1} parent=1 // pred_check
      _
    $region11: #{tpu_custom_call.1} parent=1 // pred_check_branch
      %35 = sbr.rel (0) target = $region13
    $region12: #{tpu_custom_call.1} parent=1 // pred_region
      _
    $region13: #{tpu_custom_call.1} parent=1 // pred_fallthru
      _
    %s36 = sadd.s32 0, 0
    %p37 = scmp.lt.s32.totalorder %s36, 0
    %s38 = scalar_select %p37, %s36, 0
    %p39 = scmp.lt.s32.totalorder %s38, 0
    %s40 = scalar_select %p39, %s38, 0
    %s41 = smul.addr %s40, 8
    %s42 = scalar_lea.vmem %s0, %s41
    %s43 = sadd.s32 0, 0
    %p44 = scmp.lt.s32.totalorder %s43, 0
    %s45 = scalar_select %p44, %s43, 0
    %p46 = scmp.lt.s32.totalorder %s45, 0
    %s47 = scalar_select %p46, %s45, 0
    %s48 = smul.addr %s47, 8
    %s49 = scalar_lea.vmem %s1, %s48
    %s50 = sadd.s32 0, 0
    %p51 = scmp.lt.s32.totalorder %s50, 0
    %s52 = scalar_select %p51, %s50, 0
    %p53 = scmp.lt.s32.totalorder %s52, 0
    %s54 = scalar_select %p53, %s52, 0
    %s55 = smul.addr %s54, 8
    %s56 = scalar_lea.vmem %s0, %s55
    %s57 = sadd.s32 0, 0
    %p58 = scmp.lt.s32.totalorder %s57, 0
    %s59 = scalar_select %p58, %s57, 0
    %s60 = sadd.s32 0, 0
    %p61 = scmp.lt.s32.totalorder %s60, 0
    %s62 = scalar_select %p61, %s60, 0
    %p63 = scmp.lt.s32.totalorder %s62, 0
    %s64 = scalar_select %p63, %s62, 0
    %s65 = smul.addr %s64, 8
    %s66 = scalar_lea.vmem %s1, %s65
    %s67 = sadd.s32 0, 0
    %p68 = scmp.lt.s32.totalorder %s67, 0
    %s69 = scalar_select %p68, %s67, 0
    %p70 = scmp.eq.s32.totalorder 0, 0
    // Predicated region
    $region14: #{tpu_custom_call.1} parent=1 // pred_check
      %p71 = pneg %p70
    $region15: #{tpu_custom_call.1} parent=1 // pred_check_branch
      %73 = sbr.rel (%p71) target = $region17
    $region16: #{tpu_custom_call.1} parent=1 // pred_region
      %74 = vst [vmem:[#allocation2] sm:$0xff] 0.0
    $region17: #{tpu_custom_call.1} parent=1 // pred_fallthru
      _
    %v75 = vld [vmem:[%s56] sm:$0xff]
    %v76 = vld [vmem:[%s66] sm:$0xff]
    %s77 = sld [smem:[#allocation3]]
    %s78 = sadd.s32 0, 0
    %s79 = smul.u32 %s78, 8
    %v80 = vlaneseq
    %v81 = vshrl.u32 %v80, 7
    %v82 = vstv %s79
    %v83 = vadd.s32 %v82, %v81
    %vm84 = vcmp.lt.s32.totalorder %v83, 8
    %vm85 = vcmask 130048
    %v86 = vsel %vm85, %v75, -inf
    %87 = vmax.xlane.f32.xlu0 %v86
    %v88 = vpop.xlane.xlu0 %87
    %v89 = vlaneseq
    %v90 = vand.u32 %v89, 127
    %vm91 = vcmp.eq.f32.partialorder %v75, %v88
    %v92 = vsel %vm91, %v90, 16
    %v93 = vsel %vm85, %v92, 2147483647
    %v94 = vand.u32 %v93, 65535
    %v95 = vshra.s32 %v93, 16
    %v96 = vcvt.s32.f32 %v94
    %v97 = vcvt.s32.f32 %v95
    %98 = vmin.xlane.f32.xlu0 %v97
    %v99 = vpop.xlane.xlu0 %98
    %vm100 = vcmp.eq.f32.partialorder %v97, %v99
    %v101 = vsel %vm100, %v96, inf
    %102 = vmin.xlane.f32.xlu0 %v101
    %v103 = vpop.xlane.xlu0 %102
    %v104 = vcvt.f32.s32 %v103
    %v105 = vcvt.f32.s32 %v99
    %v106 = vshll.u32 %v105, 16
    %v107 = vadd.s32 %v106, %v104
    %v108 = vsub.f32 %v75, %v88
    %v109 = vmul.f32 %v108, 1.442695
    %v110 = vpow.pop %v109
    %v111 = vsel %vm85, %v110, 0.0
    %112 = vadd.xlane.f32.xlu0 %v111
    %v113 = vpop.xlane.xlu0 %112
    %v114 = vrcp.pop %v113
    %v115 = vmul.f32 %v113, %v114
    %v116 = vsub.f32 1.0, %v115
    %v117 = vmul.f32 %v114, %v116
    %v118 = vadd.f32 %v114, %v117
    %vm119 = vweird.f32 %v113
    %vm120 = vweird.f32 %v114
    %vm121 = vmor %vm119, %vm120
    %v122 = vsel %vm121, %v114, %v118
    %v123 = vand.u32 2147483647, %v113
    %vm124 = vcmp.eq.f32.partialorder %v123, 8.507059e+37
    %v125 = vand.u32 %v113, 2147483648
    %v126 = vor.u32 1.1754944e-38, %v125
    %v127 = vsel %vm124, %v126, %v122
    %v128 = vmul.f32 %v110, %v127
    %v129 = vadd.f32 %v128, 1e-05
    %v130 = vlog2.pop %v129
    %v131 = vmul.f32 %v130, 0.6931472
    %v132 = vmul.f32 %v128, %v131
    %v133 = vsel %vm85, %v132, 0.0
    %134 = vadd.xlane.f32.xlu0 %v133
    %v135 = vpop.xlane.xlu0 %134
    %v136 = vsub.f32 0.0, %v135
    %vm137 = vcmp.eq.s32.totalorder %v76, %v107
    %v138 = vstv %s77
    %vm139 = vcmp.le.f32.partialorder %v136, %v138
    %v140 = vtanh.pop %v136
    %v141 = vsub.f32 1.0, %v127
    %v142 = vsel %vm137, %v127, %v141
    %v143 = vsub.f32 1.0, %v140
    %v144 = vsel %vm139, %v143, %v140
    %v145 = vmul.f32 %v142, %v144
    %vm146 = vmand %vm84, %vm137
    %vm147 = vmand %vm146, %vm139
    %vm148 = vcmp.eq.s32.totalorder %v90, 0
    %v149 = vsel %vm147, 1, 0
    %150 = vset.pattern.permute.xlu0 0
    %151 = vperm.xlu0 %150, %v149
    %v152 = vpop.permute.xlu0 %151
    %vm153 = vcmp.eq.s32.totalorder %v152, 1
    %v154 = vsel %vm148, 1, 0
    %vm155 = vcmp.eq.s32.totalorder %v154, 1
    %vm156 = vmand %vm153, %vm155
    %158 = vset.pattern.permute.xlu0 0
    %159 = vperm.xlu0 %158, %v145
    %v160 = vpop.permute.xlu0 %159
    %v162 = vsel %vm156, %v160, 0.0
    %vm163 = vmxor %vm139, 1
    %vm164 = vmand %vm146, %vm163
    %vm165 = vcmp.eq.s32.totalorder %v90, 1
    %v166 = vsel %vm164, 1, 0
    %167 = vset.pattern.permute.xlu0 0
    %168 = vperm.xlu0 %167, %v166
    %v169 = vpop.permute.xlu0 %168
    %vm170 = vcmp.eq.s32.totalorder %v169, 1
    %v171 = vsel %vm165, 1, 0
    %vm172 = vcmp.eq.s32.totalorder %v171, 1
    %vm173 = vmand %vm170, %vm172
    %v174 = vsel %vm173, %v160, %v162
    %vm175 = vmxor %vm137, 1
    %vm176 = vmand %vm84, %vm175
    %vm177 = vmand %vm176, %vm139
    %vm178 = vcmp.eq.s32.totalorder %v90, 2
    %v179 = vsel %vm177, 1, 0
    %180 = vset.pattern.permute.xlu0 0
    %181 = vperm.xlu0 %180, %v179
    %v182 = vpop.permute.xlu0 %181
    %vm183 = vcmp.eq.s32.totalorder %v182, 1
    %v184 = vsel %vm178, 1, 0
    %vm185 = vcmp.eq.s32.totalorder %v184, 1
    %vm186 = vmand %vm183, %vm185
    %v187 = vsel %vm186, %v160, %v174
    %vm188 = vmand %vm176, %vm163
    %vm189 = vcmp.eq.s32.totalorder %v90, 3
    %v190 = vsel %vm188, 1, 0
    %191 = vset.pattern.permute.xlu0 0
    %192 = vperm.xlu0 %191, %v190
    %v193 = vpop.permute.xlu0 %192
    %vm194 = vcmp.eq.s32.totalorder %v193, 1
    %v195 = vsel %vm189, 1, 0
    %vm196 = vcmp.eq.s32.totalorder %v195, 1
    %vm197 = vmand %vm194, %vm196
    %v198 = vsel %vm197, %v160, %v187
    %vm199 = vcmp.eq.s32.totalorder %v90, 4
    %v200 = vsel %vm84, 1, 0
    %vm201 = vcmp.eq.s32.totalorder %v200, 1
    %v202 = vsel %vm199, 1, 0
    %vm203 = vcmp.eq.s32.totalorder %v202, 1
    %vm204 = vmand %vm201, %vm203
    %v205 = vsel %vm204, %v136, %v198
    %v206 = vld [vmem:[#allocation2] sm:$0xff]
    %v207 = vadd.f32 %v206, %v205
    %208 = vst [vmem:[#allocation2] sm:$0xff] %v207
    // Predicated region
    $region18: #{tpu_custom_call.1} parent=1 // pred_check
      %p209 = pneg %p70
    $region19: #{tpu_custom_call.1} parent=1 // pred_check_branch
      %211 = sbr.rel (%p209) target = $region21
    $region20: #{tpu_custom_call.1} parent=1 // pred_region
      %v212 = vld [vmem:[#allocation2] sm:$0xff]
      %v213 = vrot.slane %v212, 4
      %v214 = vadd.f32 %v212, %v213
      %v215 = vrot.slane %v214, 2
      %v216 = vadd.f32 %v214, %v215
      %v217 = vrot.slane %v216, 1
      %v218 = vadd.f32 %v216, %v217
      %219 = vst [vmem:[#allocation4] sm:$0xff] %v218
    $region21: #{tpu_custom_call.1} parent=1 // pred_fallthru
      _
    // Predicated region
    $region22: #{tpu_custom_call.1} parent=1 // pred_check
      _
    $region23: #{tpu_custom_call.1} parent=1 // pred_check_branch
      %221 = sbr.rel (0) target = $region25
    $region24: #{tpu_custom_call.1} parent=1 // pred_region
      %223 = vsyncadd [#allocation5], 0
      %s225 = sshll.u32 [#allocation4], 4
      %s226 = int_to_ptr.vmem [resolvable:$true] %s225
      %s227 = sshll.u32 %s3, 4
      %s228 = int_to_ptr.hbm [resolvable:$true] %s227
      %230 = dma.vmem_to_hbm [thread:$0]  %s226, 128, %s228, [#allocation5]
    $region25: #{tpu_custom_call.1} parent=1 // pred_fallthru
      _
    // Predicated region
    $region26: #{tpu_custom_call.1} parent=1 // pred_check
      _
    $region27: #{tpu_custom_call.1} parent=1 // pred_check_branch
      %232 = sbr.rel (0) target = $region29
    $region28: #{tpu_custom_call.1} parent=1 // pred_region
      %234 = dma.done [#allocation5], 128
    $region29: #{tpu_custom_call.1} parent=1 // pred_fallthru
      _
    %235 = vsyncpa [#allocation5], 1

</llo_original>
